<compile_context>
chip_gen: v6e
topology: v6e:2x2x1
jax: 0.10.0
libtpu: 0.0.40
codegen_flags: <defaults>
</compile_context>

<pallas_src>
import jax
import jax.numpy as jnp
from jax.experimental import pallas as pl
from jax.experimental.pallas import tpu as pltpu


def _swish_kernel(x_ref, o_ref):
    # Compute in f32 regardless of storage dtype (free in-vreg upcast; HBM
    # traffic stays at the input dtype width).
    xf = x_ref[...].astype(jnp.float32)
    # Exact sigmoid: exp on the EUP, exact divide. The kernel is DMA-bound so
    # the exact reciprocal is wall-clock free; extremes are handled correctly
    # (exp(-x) -> inf  =>  sig -> 0;  exp(-x) -> 0  =>  sig -> 1).
    sig = 1.0 / (1.0 + jnp.exp(-xf))
    o_ref[...] = (xf * sig).astype(o_ref.dtype)


def _round_up(a, b):
    return -(-a // b) * b


def swish(x, *, target_block_bytes=4 * 1024 * 1024, small_fallback_elems=32 * 1024):
    """Elementwise swish: x * sigmoid(x). Any shape, any float dtype."""
    orig_shape = x.shape
    dtype = x.dtype
    n = x.size
    if n == 0:
        return x

    # Tiny activations: XLA's fused elementwise is already at roofline; the
    # slab reshape + kernel launch would dominate.
    if n < small_fallback_elems:
        return x * jax.nn.sigmoid(x)

    itemsize = jnp.dtype(dtype).itemsize
    # Sublane packing multiple: 8 for 4-byte, 16 for 2-byte, 32 for 1-byte.
    sublane = max(8, 32 // itemsize)

    # 1) Lane width: prefer the largest multiple of 128 (<= 4096) that divides
    #    n (no-pad fast path), else the widest that still leaves >= sublane rows.
    lane = None
    for w in (4096, 2048, 1024, 512, 256, 128):
        if n % w == 0 and n // w >= sublane:
            lane = w
            break
    if lane is None:
        lane = 128
        for w in (4096, 2048, 1024, 512, 256):
            if n >= sublane * w:
                lane = w
                break

    flat = jnp.reshape(x, (-1,))
    if n % lane == 0:
        rows = n // lane
        slab = jnp.reshape(flat, (rows, lane))
        padded = False
    else:
        # TODO(synk): an in-kernel masked tail (scalar-prefetched n + masked
        # pltpu.store) would avoid this extra HBM pad/slice pass for ragged
        # sizes; aligned activation sizes already take the no-copy path above.
        rows = _round_up(-(-n // lane), sublane)
        flat = jnp.pad(flat, (0, rows * lane - n))
        slab = jnp.reshape(flat, (rows, lane))
        padded = True

    # 2) Rows per block sized so one block is ~target_block_bytes (default
    #    4 MiB -> 16 MiB double-buffered; explicit vmem_limit_bytes below keeps
    #    this safe on v5e's 16 MiB default scoped limit and leaves headroom on
    #    v7x's 64 MiB physical VMEM).
    bytes_per_row = lane * itemsize
    tile_rows = max(sublane, (target_block_bytes // bytes_per_row) // sublane * sublane)

    if tile_rows >= rows:
        if rows >= 2 * sublane:
            # Medium tensor that would fit in one block: split into >= 2 grid
            # steps so both v7x TensorCores get work (harmless on v5e/v6e).
            tile_rows = _round_up(-(-rows // 2), sublane)
        else:
            # Single small block; full-array dim is always a legal block dim.
            tile_rows = rows

    grid = pl.cdiv(rows, tile_rows)  # partial last block is masked by Pallas

    out = pl.pallas_call(
        _swish_kernel,
        out_shape=jax.ShapeDtypeStruct((rows, lane), dtype),
        grid_spec=pltpu.PrefetchScalarGridSpec(
            num_scalar_prefetch=0,
            grid=(grid,),
            in_specs=[pl.BlockSpec((tile_rows, lane), lambda i: (i, 0))],
            out_specs=pl.BlockSpec((tile_rows, lane), lambda i: (i, 0)),
        ),
        compiler_params=pltpu.CompilerParams(
            dimension_semantics=("parallel",),
            vmem_limit_bytes=32 * 1024 * 1024,
        ),
    )(slab)

    out_flat = jnp.reshape(out, (-1,))
    if padded:
        out_flat = out_flat[:n]
    return jnp.reshape(out_flat, orig_shape)


if __name__ == "__main__":
    key = jax.random.PRNGKey(0)
    # NCHW input, same convention a conv net would feed this activation.
    x = jax.random.normal(key, (2, 4, 16, 16), dtype=jnp.float32)

    # Force the Pallas path (the test tensor is small enough that the default
    # small-tensor fallback would otherwise skip the kernel).
    y = swish(x, small_fallback_elems=0)
    jax.block_until_ready(y)

    y_ref = x * jax.nn.sigmoid(x)
    assert y.shape == x.shape and y.dtype == x.dtype
    assert jnp.max(jnp.abs(y - y_ref)) < 1e-5

    # Ragged size exercises the pad/slice fallback path.
    x2 = jax.random.normal(jax.random.PRNGKey(1), (3, 5, 7), dtype=jnp.float32)
    y2 = swish(x2, small_fallback_elems=0)
    jax.block_until_ready(y2)
    y2_ref = x2 * jax.nn.sigmoid(x2)
    assert y2.shape == x2.shape
    assert jnp.max(jnp.abs(y2 - y2_ref)) < 1e-5

    # Default call: small-tensor XLA fast path.
    y3 = swish(x)
    jax.block_until_ready(y3)
    assert jnp.max(jnp.abs(y3 - y_ref)) < 1e-6

    print("KERNEL_OK")
</pallas_src>

<mosaic_0001>
module attributes {stable_mosaic.version = 11 : i64} {
  func.func @_swish_kernel(%arg0: i32, %arg1: memref<8x256xf32, #tpu.memory_space<vmem>>, %arg2: memref<8x256xf32, #tpu.memory_space<vmem>>) attributes {dimension_semantics = [#tpu.dimension_semantics<parallel>], iteration_bounds = array<i64: 1>, scalar_prefetch = 0 : i64, scratch_operands = 0 : i64, tpu.core_type = #tpu.core_type<tc>, window_params = [{transform_indices = @transform_0, window_bounds = array<i64: 8, 256>}, {transform_indices = @transform_1, window_bounds = array<i64: 8, 256>}]} {
    %c0 = arith.constant 0 : index
    %c0_0 = arith.constant 0 : index
    %0 = vector.load %arg1[%c0, %c0_0] : memref<8x256xf32, #tpu.memory_space<vmem>>, vector<8x256xf32>
    %cst = arith.constant 0.000000e+00 : f32
    %1 = vector.broadcast %cst : f32 to vector<8x256xf32>
    %2 = arith.subf %1, %0 : vector<8x256xf32>
    %3 = math.exp %2 : vector<8x256xf32>
    %cst_1 = arith.constant 1.000000e+00 : f32
    %4 = vector.broadcast %cst_1 : f32 to vector<8x256xf32>
    %5 = arith.addf %4, %3 : vector<8x256xf32>
    %cst_2 = arith.constant 1.000000e+00 : f32
    %6 = vector.broadcast %cst_2 : f32 to vector<8x256xf32>
    %7 = arith.divf %6, %5 : vector<8x256xf32>
    %8 = arith.mulf %0, %7 : vector<8x256xf32>
    %c0_3 = arith.constant 0 : index
    %c0_4 = arith.constant 0 : index
    %9 = vector.load %arg2[%c0_3, %c0_4] : memref<8x256xf32, #tpu.memory_space<vmem>>, vector<8x256xf32>
    tpu.vector_store %arg2[%c0_3, %c0_4], %8 {strides = array<i32>} : memref<8x256xf32, #tpu.memory_space<vmem>>, vector<8x256xf32>,
    return
  }
  func.func @transform_0(%arg0: i32) -> (i32, i32) {
    %c0_i32 = arith.constant 0 : i32
    %c0_i32_0 = arith.constant 0 : i32
    return %arg0, %c0_i32 : i32, i32
  }
  func.func @transform_1(%arg0: i32) -> (i32, i32) {
    %c0_i32 = arith.constant 0 : i32
    %c0_i32_0 = arith.constant 0 : i32
    return %arg0, %c0_i32 : i32, i32
  }
}

</mosaic_0001>

<llo_original>
// kernel: tpu_custom_call.1
$region0: #{tpu_custom_call.1}
  #allocation0 [shape = 'u32[]', space=smem, size = 0x4, offset = 0x4, fixed_abs, tag = 'smem constant byte address 0x4 - core index']
  #allocation1 [shape = 'u32[144,128]{1,0:T(1,128)}', space=vmem, size = 0x12000, scoped, tag = 'internal scratch']
  %s0 = inlined_call_operand.hbm [shape: f32[8,256], index: 0, kind: input, shape index: {}]
  %s1 = inlined_call_operand.hbm [shape: f32[8,256], index: 1, kind: output, shape index: {}]
  %s2 = sld [smem:[#allocation0]]
  $region18: #{tpu_custom_call.1} parent=0
    _
  %s4 = ssub.s32 1, %s2
  %s5 = scalar_select 0, %s4, %s2
  $region1: #{tpu_custom_call.1} parent=0
    #allocation2 [shape = 'u8[8192]{0}', space=vmem, size = 0x2000, scoped, tag = 'input window, operand 0, single buffered']
    #allocation3 [shape = 's32[1]{0}', space=sflag, size = 0x4, scoped, tag = 'scoped memory for tpu_custom_call.1']
    #allocation4 [shape = 's32[1]{0}', space=sflag, size = 0x4, scoped, tag = 'scoped memory for tpu_custom_call.1']
    #allocation5 [shape = 'u8[8192]{0}', space=vmem, size = 0x2000, scoped, tag = 'output window, operand 0, single buffered']
    %6 = vsyncpa [#allocation3], 0
    %7 = vsyncpa [#allocation4], 0
    // Predicated region
    $region2: #{tpu_custom_call.1} parent=1 // pred_check
      _
    $region3: #{tpu_custom_call.1} parent=1 // pred_check_branch
      %9 = sbr.rel (0) target = $region5
    $region4: #{tpu_custom_call.1} parent=1 // pred_region
      %s11 = ssub.s32 256, 256
      %12 = vsyncadd [#allocation3], %s11
      %s14 = sshll.u32 [#allocation2], 4
      %s15 = int_to_ptr.vmem [resolvable:$true] %s14
      %17 = dma.hbm_to_vmem [thread:$0]  %s0, 256, %s15, [#allocation3]
    $region5: #{tpu_custom_call.1} parent=1 // pred_fallthru
      _
    // Predicated region
    $region6: #{tpu_custom_call.1} parent=1 // pred_check
      _
    $region7: #{tpu_custom_call.1} parent=1 // pred_check_branch
      %19 = sbr.rel (0) target = $region9
    $region8: #{tpu_custom_call.1} parent=1 // pred_region
      %20 = dma.done [#allocation3], 256
    $region9: #{tpu_custom_call.1} parent=1 // pred_fallthru
      _
    %v21 = vld [vmem:[#allocation2] sm:$0xff]
    %v22 = vld [vmem:[#allocation2 + $0x8] sm:$0xff]
    %v23 = vsub.f32 0.0, %v21
    %v24 = vsub.f32 0.0, %v22
    %v25 = vmul.f32 %v23, 1.442695
    %v26 = vpow.pop %v25
    %v27 = vmul.f32 %v24, 1.442695
    %v28 = vpow.pop %v27
    %v29 = vadd.f32 %v26, 1.0
    %v30 = vadd.f32 %v28, 1.0
    %v31 = vrcp.pop %v29
    %v32 = vmul.f32 1.0, %v31
    %v33 = vrcp.pop %v30
    %v34 = vmul.f32 1.0, %v33
    %v35 = vmul.f32 %v21, %v32
    %v36 = vmul.f32 %v22, %v34
    %37 = vst [vmem:[#allocation5] sm:$0xff] %v35
    %38 = vst [vmem:[#allocation5 + $0x8] sm:$0xff] %v36
    // Predicated region
    $region10: #{tpu_custom_call.1} parent=1 // pred_check
      _
    $region11: #{tpu_custom_call.1} parent=1 // pred_check_branch
      %40 = sbr.rel (0) target = $region13
    $region12: #{tpu_custom_call.1} parent=1 // pred_region
      %s42 = ssub.s32 256, 256
      %43 = vsyncadd [#allocation4], %s42
      %s45 = sshll.u32 [#allocation5], 4
      %s46 = int_to_ptr.vmem [resolvable:$true] %s45
      %48 = dma.vmem_to_hbm [thread:$0]  %s46, 256, %s1, [#allocation4]
    $region13: #{tpu_custom_call.1} parent=1 // pred_fallthru
      _
    // Predicated region
    $region14: #{tpu_custom_call.1} parent=1 // pred_check
      _
    $region15: #{tpu_custom_call.1} parent=1 // pred_check_branch
      %50 = sbr.rel (0) target = $region17
    $region16: #{tpu_custom_call.1} parent=1 // pred_region
      %51 = dma.done [#allocation4], 256
    $region17: #{tpu_custom_call.1} parent=1 // pred_fallthru
      _
    %52 = vsyncpa [#allocation3], 1
    %53 = vsyncpa [#allocation4], 1

</llo_original>
